<compile_context>
chip_gen: v7x
topology: tpu7x:2x2x1
jax: 0.10.0
libtpu: 0.0.40
codegen_flags: <defaults>
</compile_context>

<pallas_src>
import functools

import jax
import jax.numpy as jnp
from jax import lax
from jax.experimental import pallas as pl
from jax.experimental.pallas import tpu as pltpu

UPPER_BOUND = 1.0
IGNORE_INDEX = 255


def _round_up(x, m):
    return (x + m - 1) // m * m


# ---------------------------------------------------------------------------
# Fused kernel: grid = (N images, S pixel splits, tiles per split)
# ---------------------------------------------------------------------------
def _fused_loss_kernel(seg_ref, segt_ref, edge_ref, edget_ref, out_ref, acc_ref,
                       *, num_classes, tp, n_pix, tiles_per_split, needs_mask):
    s = pl.program_id(1)
    p = pl.program_id(2)
    n_p = pl.num_programs(2)

    @pl.when(p == 0)
    def _init():
        acc_ref[...] = jnp.zeros_like(acc_ref)

    x = seg_ref[0].astype(jnp.float32)        # (C, TP)  seg logits
    t = segt_ref[0]                           # (1, TP)  int32 labels (255 = ignore)
    e = edge_ref[0].astype(jnp.float32)       # (Ce, TP) edge logits
    et = edget_ref[0].astype(jnp.float32)     # (Ce, TP) edge targets (0 / 1 / >1)

    cls = lax.broadcasted_iota(jnp.int32, x.shape, 0)
    if needs_mask:
        # tail-tile mask (replaces the old wrapper-side jnp.pad): lanes whose
        # global pixel index is >= P contain unspecified data and are zeroed.
        tile = s * tiles_per_split + p
        lane = lax.broadcasted_iota(jnp.int32, (1, tp), 1)
        in_b = (tile * tp + lane) < n_pix                        # (1, TP)
        is_cls = (t == cls) & in_b                               # (C, TP)
        has_cls = (t >= 0) & (t < num_classes) & in_b            # (1, TP)
        e_valid = in_b
    else:
        is_cls = (t == cls)
        has_cls = (t >= 0) & (t < num_classes)
        e_valid = None

    onehot = is_cls.astype(jnp.float32)                          # (C, TP)

    # per-pixel log-sum-exp + selected logit (row level; logp never materialized)
    m = jnp.max(x, axis=0, keepdims=True)
    lse = m + jnp.log(jnp.sum(jnp.exp(x - m), axis=0, keepdims=True))
    sel_x = jnp.sum(jnp.where(is_cls, x, 0.0), axis=0, keepdims=True)      # (1, TP)
    selp = jnp.where(has_cls, sel_x - lse, 0.0)                            # (1, TP)

    # attention gate: max_c sigmoid(e) > 0.5  <=>  max_c e > 0   (no exp/div)
    gate = (jnp.max(e, axis=0, keepdims=True) > 0.0).astype(jnp.float32)   # (1, TP)
    g_onehot = onehot * gate

    seg_cnt = jnp.sum(onehot, axis=1, keepdims=True)                       # (C, 1)
    seg_sum = jnp.sum(onehot * selp, axis=1, keepdims=True)
    att_cnt = jnp.sum(g_onehot, axis=1, keepdims=True)
    att_sum = jnp.sum(g_onehot * selp, axis=1, keepdims=True)
    cls_part = jnp.concatenate([seg_cnt, seg_sum, att_cnt, att_sum], axis=1)  # (C, 4)

    # edge BCE-with-logits partial sums (class-balance weights applied in glue)
    pos = (et == 1.0)
    neg = (et == 0.0)
    bce = jnp.maximum(e, 0.0) - e * et + jnp.log(1.0 + jnp.exp(-jnp.abs(e)))
    if e_valid is not None:
        pos = pos & e_valid
        neg = neg & e_valid
        bce = jnp.where(e_valid, bce, 0.0)
    pos = pos.astype(jnp.float32)
    neg = neg.astype(jnp.float32)
    bce_part = jnp.concatenate(
        [jnp.sum(pos, keepdims=True), jnp.sum(neg, keepdims=True),
         jnp.sum(pos * bce, keepdims=True), jnp.sum(neg * bce, keepdims=True)],
        axis=1)                                                            # (1, 4)

    acc_ref[0:num_classes, :] += cls_part
    acc_ref[num_classes:num_classes + 1, :] += bce_part

    @pl.when(p == n_p - 1)
    def _finalize():
        out_ref[0, 0, :, :] = acc_ref[...]


# ---------------------------------------------------------------------------
# Wrapper: GSCNNLoss.forward((segin, edgein), (segmask, edgemask)), NCHW
# ---------------------------------------------------------------------------
def gscnn_loss(segin, edgein, segmask, edgemask, *, tp=None, pixel_splits=None,
               vmem_limit_bytes=32 * 1024 * 1024):
    N, C, H, W = segin.shape
    Ce = edgein.shape[1]
    P = H * W
    M = N * Ce * H * W                   # BCE mean is over ALL edge elements

    # pixel tile: large enough to amortize the ~0.35us per-grid-step overhead,
    # small enough that all four double-buffered input blocks stay well under
    # the 32 MiB scoped-VMEM default on every generation (incl. v7x).
    if tp is None:
        per_pix = (C * segin.dtype.itemsize + 4
                   + Ce * (edgein.dtype.itemsize + edgemask.dtype.itemsize))
        budget = 24 * 1024 * 1024
        tp = min(32768, int(budget // (2 * per_pix)))
        tp = max(128, (tp // 128) * 128)
        tp = min(tp, _round_up(P, 128))
    assert tp % 128 == 0
    n_tiles = pl.cdiv(P, tp)

    # 2-way pixel split so both v7x TensorCores are busy when the (parallel)
    # image axis alone cannot be sharded evenly; no-op on v5e/v6e.
    if pixel_splits is None:
        pixel_splits = 2 if (N % 2 == 1 and n_tiles >= 2) else 1
    S = pixel_splits
    tiles_per_split = pl.cdiv(n_tiles, S)
    needs_mask = (S * tiles_per_split * tp) != P

    seg_l = segin.reshape(N, C, P)                        # native dtype (bf16 ok)
    seg_t = segmask if segmask.dtype == jnp.int32 else segmask.astype(jnp.int32)
    seg_t = seg_t.reshape(N, 1, P)
    edge_l = edgein.reshape(N, Ce, P)
    edge_t = edgemask.reshape(N, Ce, P)

    last = n_tiles - 1

    def pix_block(si, pi):
        # Tiles past the last real tile (possible only with the 2-way split)
        # re-read the last tile; the in-kernel mask zeroes their contribution.
        return jnp.minimum(si * tiles_per_split + pi, last)

    kernel = functools.partial(
        _fused_loss_kernel, num_classes=C, tp=tp, n_pix=P,
        tiles_per_split=tiles_per_split, needs_mask=needs_mask)

    out = pl.pallas_call(
        kernel,
        out_shape=jax.ShapeDtypeStruct((N, S, C + 1, 4), jnp.float32),
        grid=(N, S, tiles_per_split),
        in_specs=[
            pl.BlockSpec((1, C, tp), lambda i, s, p: (i, 0, pix_block(s, p))),
            pl.BlockSpec((1, 1, tp), lambda i, s, p: (i, 0, pix_block(s, p))),
            pl.BlockSpec((1, Ce, tp), lambda i, s, p: (i, 0, pix_block(s, p))),
            pl.BlockSpec((1, Ce, tp), lambda i, s, p: (i, 0, pix_block(s, p))),
        ],
        out_specs=pl.BlockSpec((1, 1, C + 1, 4), lambda i, s, p: (i, s, 0, 0)),
        scratch_shapes=[pltpu.VMEM((C + 1, 4), jnp.float32)],
        compiler_params=pltpu.CompilerParams(
            dimension_semantics=("parallel", "parallel", "arbitrary"),
            vmem_limit_bytes=vmem_limit_bytes,
        ),
    )(seg_l, seg_t, edge_l, edge_t)

    # ---- tiny per-image finalize in JAX glue (histogram weights + divisions) --
    part = jnp.sum(out, axis=1)                        # (N, C+1, 4) combine splits
    cls_part = part[:, :C, :]                          # (N, C, 4)
    seg_cnt, seg_sum = cls_part[..., 0], cls_part[..., 1]
    att_cnt, att_sum = cls_part[..., 2], cls_part[..., 3]
    bce_tot = jnp.sum(part[:, C, :], axis=0)           # (4,) over images

    def image_nll(cnt, sm):
        # np.histogram(..., bins=range(C+1), normed=True) == counts / valid_total
        total = jnp.sum(cnt, axis=-1, keepdims=True)
        hist = cnt / total
        w = (cnt > 0.0).astype(jnp.float32) * UPPER_BOUND * (1.0 - hist) + 1.0
        return -(jnp.sum(w * sm, axis=-1) / jnp.sum(w * cnt, axis=-1))

    seg_loss = jnp.sum(image_nll(seg_cnt, seg_sum))
    att_loss = jnp.sum(image_nll(att_cnt, att_sum))

    pos_n, neg_n, s_pos, s_neg = bce_tot[0], bce_tot[1], bce_tot[2], bce_tot[3]
    sum_n = pos_n + neg_n
    # class-balanced BCE, mean over all elements (size_average=True)
    edge_loss = 20.0 * ((neg_n / sum_n) * s_pos + (pos_n / sum_n) * s_neg) / M
    return seg_loss + att_loss + edge_loss


# ---------------------------------------------------------------------------
# Pure-JAX reference (mirrors the PyTorch semantics) for verification.
# ---------------------------------------------------------------------------
def _seg_loss_ref(logits, target):
    N, C, H, W = logits.shape
    total = jnp.float32(0.0)
    for i in range(N):
        x = logits[i].reshape(C, -1).astype(jnp.float32)
        t = target[i].reshape(-1)
        logp = jax.nn.log_softmax(x, axis=0)
        counts = jnp.stack([jnp.sum((t == c).astype(jnp.float32)) for c in range(C)])
        hist = counts / jnp.sum(counts)
        w = (counts > 0).astype(jnp.float32) * UPPER_BOUND * (1.0 - hist) + 1.0
        valid = ((t >= 0) & (t < C))
        tc = jnp.where(valid, t, 0)
        lp = jnp.take_along_axis(logp, tc[None, :], axis=0)[0]
        wp = w[tc] * valid.astype(jnp.float32)
        total = total + (-jnp.sum(wp * lp) / jnp.sum(wp))
    return total


def _bce_ref(x, t):
    x = x.reshape(-1).astype(jnp.float32)
    t = t.reshape(-1).astype(jnp.float32)
    pos = (t == 1.0).astype(jnp.float32)
    neg = (t == 0.0).astype(jnp.float32)
    pos_num = jnp.sum(pos)
    neg_num = jnp.sum(neg)
    s = pos_num + neg_num
    w = pos * (neg_num / s) + neg * (pos_num / s)
    l = jnp.maximum(x, 0.0) - x * t + jnp.log(1.0 + jnp.exp(-jnp.abs(x)))
    return jnp.sum(w * l) / x.shape[0]


def _ref_loss(segin, edgein, segmask, edgemask):
    seg_loss = _seg_loss_ref(segin, segmask)
    sig = 1.0 / (1.0 + jnp.exp(-edgein.astype(jnp.float32)))
    att_t = jnp.where(jnp.max(sig, axis=1) > 0.5, segmask, IGNORE_INDEX).astype(jnp.int32)
    att_loss = _seg_loss_ref(segin, att_t)
    edge_loss = 20.0 * _bce_ref(edgein, edgemask)
    return seg_loss + att_loss + edge_loss


if __name__ == "__main__":
    def make_inputs(key, N, C, H, W):
        k1, k2, k3, k4, k5 = jax.random.split(key, 5)
        segin = jax.random.normal(k1, (N, C, H, W), jnp.float32)      # seg logits
        edgein = jax.random.normal(k2, (N, 1, H, W), jnp.float32)     # edge logits
        segmask = jax.random.randint(k3, (N, H, W), 0, C, jnp.int32)  # class labels
        ignore = jax.random.bernoulli(k4, 0.05, (N, H, W))
        segmask = jnp.where(ignore, IGNORE_INDEX, segmask).astype(jnp.int32)
        edgemask = jax.random.bernoulli(k5, 0.5, (N, 1, H, W)).astype(jnp.float32)
        edgemask = edgemask.at[0, 0, 0, 0].set(2.0)   # exercise the ">1 ignore" path
        return segin, edgein, segmask, edgemask

    key = jax.random.PRNGKey(0)
    k_a, k_b, k_c = jax.random.split(key, 3)

    cases = [
        # multi-tile accumulation, divisible P, no split
        (make_inputs(k_a, 2, 8, 16, 16), dict(tp=128)),
        # N==1 -> 2-way pixel split with clamped + masked tail tiles
        (make_inputs(k_b, 1, 8, 24, 24), dict(tp=128)),
        # default tile selection, single partial (masked) tile
        (make_inputs(k_c, 2, 8, 10, 10), dict()),
    ]
    for (segin, edgein, segmask, edgemask), kw in cases:
        loss_fn = jax.jit(functools.partial(gscnn_loss, **kw))
        out = loss_fn(segin, edgein, segmask, edgemask)
        out = jax.block_until_ready(out)
        ref = _ref_loss(segin, edgein, segmask, edgemask)
        assert bool(jnp.isfinite(out)), out
        assert bool(jnp.allclose(out, ref, rtol=1e-4, atol=1e-4)), (out, ref, kw)
    print("KERNEL_OK")
</pallas_src>

<mosaic_0001>
module attributes {stable_mosaic.version = 11 : i64} {
  func.func @_fused_loss_kernel(%arg0: i32, %arg1: i32, %arg2: i32, %arg3: memref<1x8x128xf32, #tpu.memory_space<vmem>>, %arg4: memref<1x1x128xi32, #tpu.memory_space<vmem>>, %arg5: memref<1x1x128xf32, #tpu.memory_space<vmem>>, %arg6: memref<1x1x128xf32, #tpu.memory_space<vmem>>, %arg7: memref<1x1x9x4xf32, #tpu.memory_space<vmem>>, %arg8: memref<9x4xf32, #tpu.memory_space<vmem>>) attributes {dimension_semantics = [#tpu.dimension_semantics<parallel>, #tpu.dimension_semantics<parallel>, #tpu.dimension_semantics<arbitrary>], iteration_bounds = array<i64: 2, 1, 2>, scalar_prefetch = 0 : i64, scratch_operands = 1 : i64, tpu.core_type = #tpu.core_type<tc>, window_params = [{transform_indices = @transform_0, window_bounds = array<i64: 1, 8, 128>}, {transform_indices = @transform_1, window_bounds = array<i64: 1, 1, 128>}, {transform_indices = @transform_2, window_bounds = array<i64: 1, 1, 128>}, {transform_indices = @transform_3, window_bounds = array<i64: 1, 1, 128>}, {transform_indices = @transform_4, window_bounds = array<i64: 1, 1, 9, 4>}]} {
    %c0_i32 = arith.constant 0 : i32
    %0 = arith.cmpi eq, %arg2, %c0_i32 : i32
    %1 = arith.extui %0 : i1 to i32
    %c0_i32_0 = arith.constant 0 : i32
    %2 = arith.cmpi ne, %1, %c0_i32_0 : i32
    scf.if %2 {
      %cst_40 = arith.constant 0.000000e+00 : f32
      %110 = vector.broadcast %cst_40 : f32 to vector<9x4xf32>
      %c0_41 = arith.constant 0 : index
      %c0_42 = arith.constant 0 : index
      %111 = vector.load %arg8[%c0_41, %c0_42] : memref<9x4xf32, #tpu.memory_space<vmem>>, vector<9x4xf32>
      tpu.vector_store %arg8[%c0_41, %c0_42], %110 {strides = array<i32>} : memref<9x4xf32, #tpu.memory_space<vmem>>, vector<9x4xf32>,
    } else {
    }
    %c0 = arith.constant 0 : index
    %c0_1 = arith.constant 0 : index
    %c0_2 = arith.constant 0 : index
    %3 = vector.load %arg3[%c0, %c0_1, %c0_2] : memref<1x8x128xf32, #tpu.memory_space<vmem>>, vector<1x8x128xf32>
    %4 = vector.shape_cast %3 : vector<1x8x128xf32> to vector<8x128xf32>
    %c0_3 = arith.constant 0 : index
    %c0_4 = arith.constant 0 : index
    %c0_5 = arith.constant 0 : index
    %5 = vector.load %arg4[%c0_3, %c0_4, %c0_5] : memref<1x1x128xi32, #tpu.memory_space<vmem>>, vector<1x1x128xi32>
    %6 = vector.shape_cast %5 : vector<1x1x128xi32> to vector<1x128xi32>
    %c0_6 = arith.constant 0 : index
    %c0_7 = arith.constant 0 : index
    %c0_8 = arith.constant 0 : index
    %7 = vector.load %arg5[%c0_6, %c0_7, %c0_8] : memref<1x1x128xf32, #tpu.memory_space<vmem>>, vector<1x1x128xf32>
    %8 = vector.shape_cast %7 : vector<1x1x128xf32> to vector<1x128xf32>
    %c0_9 = arith.constant 0 : index
    %c0_10 = arith.constant 0 : index
    %c0_11 = arith.constant 0 : index
    %9 = vector.load %arg6[%c0_9, %c0_10, %c0_11] : memref<1x1x128xf32, #tpu.memory_space<vmem>>, vector<1x1x128xf32>
    %10 = vector.shape_cast %9 : vector<1x1x128xf32> to vector<1x128xf32>
    %11 = tpu.iota {dimensions = array<i32: 0>} : vector<8x128xi32>
    %12 = vector.broadcast %6 : vector<1x128xi32> to vector<8x128xi32>
    %13 = arith.cmpi eq, %12, %11 : vector<8x128xi32>
    %c0_i32_12 = arith.constant 0 : i32
    %14 = vector.broadcast %c0_i32_12 : i32 to vector<1x128xi32>
    %15 = arith.cmpi sge, %6, %14 : vector<1x128xi32>
    %c8_i32 = arith.constant 8 : i32
    %16 = vector.broadcast %c8_i32 : i32 to vector<1x128xi32>
    %17 = arith.cmpi slt, %6, %16 : vector<1x128xi32>
    %18 = arith.andi %15, %17 : vector<1x128xi1>
    %19 = arith.extui %13 : vector<8x128xi1> to vector<8x128xi32>
    %20 = arith.sitofp %19 : vector<8x128xi32> to vector<8x128xf32>
    %cst = arith.constant dense<0xFF800000> : vector<128xf32>
    %21 = vector.multi_reduction <maximumf>, %4, %cst [0] : vector<8x128xf32> to vector<128xf32>
    %22 = vector.shape_cast %21 : vector<128xf32> to vector<1x128xf32>
    %23 = vector.broadcast %22 : vector<1x128xf32> to vector<8x128xf32>
    %24 = arith.subf %4, %23 : vector<8x128xf32>
    %25 = math.exp %24 : vector<8x128xf32>
    %cst_13 = arith.constant dense<0.000000e+00> : vector<128xf32>
    %26 = vector.multi_reduction <add>, %25, %cst_13 [0] : vector<8x128xf32> to vector<128xf32>
    %27 = vector.shape_cast %26 : vector<128xf32> to vector<1x128xf32>
    %28 = math.log %27 : vector<1x128xf32>
    %29 = arith.addf %22, %28 : vector<1x128xf32>
    %cst_14 = arith.constant 0.000000e+00 : f32
    %30 = vector.broadcast %cst_14 : f32 to vector<8x128xf32>
    %31 = arith.select %13, %4, %30 : vector<8x128xi1>, vector<8x128xf32>
    %cst_15 = arith.constant dense<0.000000e+00> : vector<128xf32>
    %32 = vector.multi_reduction <add>, %31, %cst_15 [0] : vector<8x128xf32> to vector<128xf32>
    %33 = vector.shape_cast %32 : vector<128xf32> to vector<1x128xf32>
    %34 = arith.subf %33, %29 : vector<1x128xf32>
    %cst_16 = arith.constant 0.000000e+00 : f32
    %35 = vector.broadcast %cst_16 : f32 to vector<1x128xf32>
    %36 = arith.select %18, %34, %35 : vector<1x128xi1>, vector<1x128xf32>
    %cst_17 = arith.constant dense<0xFF800000> : vector<128xf32>
    %37 = vector.multi_reduction <maximumf>, %8, %cst_17 [0] : vector<1x128xf32> to vector<128xf32>
    %38 = vector.shape_cast %37 : vector<128xf32> to vector<1x128xf32>
    %cst_18 = arith.constant 0.000000e+00 : f32
    %39 = vector.broadcast %cst_18 : f32 to vector<1x128xf32>
    %40 = arith.cmpf ogt, %38, %39 : vector<1x128xf32>
    %41 = arith.extui %40 : vector<1x128xi1> to vector<1x128xi32>
    %42 = arith.sitofp %41 : vector<1x128xi32> to vector<1x128xf32>
    %43 = vector.broadcast %42 : vector<1x128xf32> to vector<8x128xf32>
    %44 = arith.mulf %20, %43 : vector<8x128xf32>
    %cst_19 = arith.constant dense<0.000000e+00> : vector<8xf32>
    %45 = vector.multi_reduction <add>, %20, %cst_19 [1] : vector<8x128xf32> to vector<8xf32>
    %46 = vector.shape_cast %45 : vector<8xf32> to vector<8x1xf32>
    %47 = vector.broadcast %36 : vector<1x128xf32> to vector<8x128xf32>
    %48 = arith.mulf %20, %47 : vector<8x128xf32>
    %cst_20 = arith.constant dense<0.000000e+00> : vector<8xf32>
    %49 = vector.multi_reduction <add>, %48, %cst_20 [1] : vector<8x128xf32> to vector<8xf32>
    %50 = vector.shape_cast %49 : vector<8xf32> to vector<8x1xf32>
    %cst_21 = arith.constant dense<0.000000e+00> : vector<8xf32>
    %51 = vector.multi_reduction <add>, %44, %cst_21 [1] : vector<8x128xf32> to vector<8xf32>
    %52 = vector.shape_cast %51 : vector<8xf32> to vector<8x1xf32>
    %53 = vector.broadcast %36 : vector<1x128xf32> to vector<8x128xf32>
    %54 = arith.mulf %44, %53 : vector<8x128xf32>
    %cst_22 = arith.constant dense<0.000000e+00> : vector<8xf32>
    %55 = vector.multi_reduction <add>, %54, %cst_22 [1] : vector<8x128xf32> to vector<8xf32>
    %56 = vector.shape_cast %55 : vector<8xf32> to vector<8x1xf32>
    %57 = tpu.concatenate %46, %50, %52, %56 in 1 : vector<8x1xf32>, vector<8x1xf32>, vector<8x1xf32>, vector<8x1xf32> -> vector<8x4xf32>
    %cst_23 = arith.constant 1.000000e+00 : f32
    %58 = vector.broadcast %cst_23 : f32 to vector<1x128xf32>
    %59 = arith.cmpf oeq, %10, %58 : vector<1x128xf32>
    %cst_24 = arith.constant 0.000000e+00 : f32
    %60 = vector.broadcast %cst_24 : f32 to vector<1x128xf32>
    %61 = arith.cmpf oeq, %10, %60 : vector<1x128xf32>
    %cst_25 = arith.constant 0.000000e+00 : f32
    %62 = vector.broadcast %cst_25 : f32 to vector<1x128xf32>
    %63 = arith.maximumf %8, %62 : vector<1x128xf32>
    %64 = arith.mulf %8, %10 : vector<1x128xf32>
    %65 = arith.subf %63, %64 : vector<1x128xf32>
    %66 = math.absf %8 : vector<1x128xf32>
    %cst_26 = arith.constant 0.000000e+00 : f32
    %67 = vector.broadcast %cst_26 : f32 to vector<1x128xf32>
    %68 = arith.subf %67, %66 : vector<1x128xf32>
    %69 = math.exp %68 : vector<1x128xf32>
    %cst_27 = arith.constant 1.000000e+00 : f32
    %70 = vector.broadcast %cst_27 : f32 to vector<1x128xf32>
    %71 = arith.addf %70, %69 : vector<1x128xf32>
    %72 = math.log %71 : vector<1x128xf32>
    %73 = arith.addf %65, %72 : vector<1x128xf32>
    %74 = arith.extui %59 : vector<1x128xi1> to vector<1x128xi32>
    %75 = arith.sitofp %74 : vector<1x128xi32> to vector<1x128xf32>
    %76 = arith.extui %61 : vector<1x128xi1> to vector<1x128xi32>
    %77 = arith.sitofp %76 : vector<1x128xi32> to vector<1x128xf32>
    %78 = vector.shape_cast %75 : vector<1x128xf32> to vector<1x1x128xf32>
    %cst_28 = arith.constant dense<0.000000e+00> : vector<1xf32>
    %79 = vector.multi_reduction <add>, %78, %cst_28 [1, 2] : vector<1x1x128xf32> to vector<1xf32>
    %80 = vector.shape_cast %79 : vector<1xf32> to vector<1x1x1xf32>
    %81 = vector.extract %80[0, 0, 0] : f32 from vector<1x1x1xf32>
    %82 = vector.broadcast %81 : f32 to vector<1x1xf32>
    %83 = vector.shape_cast %77 : vector<1x128xf32> to vector<1x1x128xf32>
    %cst_29 = arith.constant dense<0.000000e+00> : vector<1xf32>
    %84 = vector.multi_reduction <add>, %83, %cst_29 [1, 2] : vector<1x1x128xf32> to vector<1xf32>
    %85 = vector.shape_cast %84 : vector<1xf32> to vector<1x1x1xf32>
    %86 = vector.extract %85[0, 0, 0] : f32 from vector<1x1x1xf32>
    %87 = vector.broadcast %86 : f32 to vector<1x1xf32>
    %88 = arith.mulf %75, %73 : vector<1x128xf32>
    %89 = vector.shape_cast %88 : vector<1x128xf32> to vector<1x1x128xf32>
    %cst_30 = arith.constant dense<0.000000e+00> : vector<1xf32>
    %90 = vector.multi_reduction <add>, %89, %cst_30 [1, 2] : vector<1x1x128xf32> to vector<1xf32>
    %91 = vector.shape_cast %90 : vector<1xf32> to vector<1x1x1xf32>
    %92 = vector.extract %91[0, 0, 0] : f32 from vector<1x1x1xf32>
    %93 = vector.broadcast %92 : f32 to vector<1x1xf32>
    %94 = arith.mulf %77, %73 : vector<1x128xf32>
    %95 = vector.shape_cast %94 : vector<1x128xf32> to vector<1x1x128xf32>
    %cst_31 = arith.constant dense<0.000000e+00> : vector<1xf32>
    %96 = vector.multi_reduction <add>, %95, %cst_31 [1, 2] : vector<1x1x128xf32> to vector<1xf32>
    %97 = vector.shape_cast %96 : vector<1xf32> to vector<1x1x1xf32>
    %98 = vector.extract %97[0, 0, 0] : f32 from vector<1x1x1xf32>
    %99 = vector.broadcast %98 : f32 to vector<1x1xf32>
    %100 = tpu.concatenate %82, %87, %93, %99 in 1 : vector<1x1xf32>, vector<1x1xf32>, vector<1x1xf32>, vector<1x1xf32> -> vector<1x4xf32>
    %c0_32 = arith.constant 0 : index
    %c0_33 = arith.constant 0 : index
    %101 = vector.load %arg8[%c0_32, %c0_33] : memref<9x4xf32, #tpu.memory_space<vmem>>, vector<8x4xf32>
    %102 = arith.addf %101, %57 : vector<8x4xf32>
    %c0_34 = arith.constant 0 : index
    %c0_35 = arith.constant 0 : index
    %103 = vector.load %arg8[%c0_34, %c0_35] : memref<9x4xf32, #tpu.memory_space<vmem>>, vector<8x4xf32>
    tpu.vector_store %arg8[%c0_34, %c0_35], %102 {strides = array<i32>} : memref<9x4xf32, #tpu.memory_space<vmem>>, vector<8x4xf32>,
    %c8 = arith.constant 8 : index
    %c0_36 = arith.constant 0 : index
    %104 = vector.load %arg8[%c8, %c0_36] : memref<9x4xf32, #tpu.memory_space<vmem>>, vector<1x4xf32>
    %105 = arith.addf %104, %100 : vector<1x4xf32>
    %c8_37 = arith.constant 8 : index
    %c0_38 = arith.constant 0 : index
    %106 = vector.load %arg8[%c8_37, %c0_38] : memref<9x4xf32, #tpu.memory_space<vmem>>, vector<1x4xf32>
    tpu.vector_store %arg8[%c8_37, %c0_38], %105 {strides = array<i32>} : memref<9x4xf32, #tpu.memory_space<vmem>>, vector<1x4xf32>,
    %c1_i32 = arith.constant 1 : i32
    %107 = arith.cmpi eq, %arg2, %c1_i32 : i32
    %108 = arith.extui %107 : i1 to i32
    %c0_i32_39 = arith.constant 0 : i32
    %109 = arith.cmpi ne, %108, %c0_i32_39 : i32
    scf.if %109 {
      %c0_40 = arith.constant 0 : index
      %c0_41 = arith.constant 0 : index
      %110 = vector.load %arg8[%c0_40, %c0_41] : memref<9x4xf32, #tpu.memory_space<vmem>>, vector<9x4xf32>
      %c0_42 = arith.constant 0 : index
      %c0_43 = arith.constant 0 : index
      %c0_44 = arith.constant 0 : index
      %c0_45 = arith.constant 0 : index
      %111 = vector.load %arg7[%c0_42, %c0_43, %c0_44, %c0_45] : memref<1x1x9x4xf32, #tpu.memory_space<vmem>>, vector<1x1x9x4xf32>
      %112 = vector.shape_cast %111 : vector<1x1x9x4xf32> to vector<9x4xf32>
      %113 = vector.shape_cast %110 : vector<9x4xf32> to vector<1x1x9x4xf32>
      tpu.vector_store %arg7[%c0_42, %c0_43, %c0_44, %c0_45], %113 {strides = array<i32>} : memref<1x1x9x4xf32, #tpu.memory_space<vmem>>, vector<1x1x9x4xf32>,
    } else {
    }
    return
  }
  func.func @transform_0(%arg0: i32, %arg1: i32, %arg2: i32) -> (i32, i32, i32) {
    %c2_i32 = arith.constant 2 : i32
    %0 = arith.muli %arg1, %c2_i32 : i32
    %1 = arith.addi %0, %arg2 : i32
    %c1_i32 = arith.constant 1 : i32
    %2 = arith.minsi %1, %c1_i32 : i32
    %c0_i32 = arith.constant 0 : i32
    %c0_i32_0 = arith.constant 0 : i32
    return %arg0, %c0_i32, %2 : i32, i32, i32
  }
  func.func @transform_1(%arg0: i32, %arg1: i32, %arg2: i32) -> (i32, i32, i32) {
    %c2_i32 = arith.constant 2 : i32
    %0 = arith.muli %arg1, %c2_i32 : i32
    %1 = arith.addi %0, %arg2 : i32
    %c1_i32 = arith.constant 1 : i32
    %2 = arith.minsi %1, %c1_i32 : i32
    %c0_i32 = arith.constant 0 : i32
    %c0_i32_0 = arith.constant 0 : i32
    return %arg0, %c0_i32, %2 : i32, i32, i32
  }
  func.func @transform_2(%arg0: i32, %arg1: i32, %arg2: i32) -> (i32, i32, i32) {
    %c2_i32 = arith.constant 2 : i32
    %0 = arith.muli %arg1, %c2_i32 : i32
    %1 = arith.addi %0, %arg2 : i32
    %c1_i32 = arith.constant 1 : i32
    %2 = arith.minsi %1, %c1_i32 : i32
    %c0_i32 = arith.constant 0 : i32
    %c0_i32_0 = arith.constant 0 : i32
    return %arg0, %c0_i32, %2 : i32, i32, i32
  }
  func.func @transform_3(%arg0: i32, %arg1: i32, %arg2: i32) -> (i32, i32, i32) {
    %c2_i32 = arith.constant 2 : i32
    %0 = arith.muli %arg1, %c2_i32 : i32
    %1 = arith.addi %0, %arg2 : i32
    %c1_i32 = arith.constant 1 : i32
    %2 = arith.minsi %1, %c1_i32 : i32
    %c0_i32 = arith.constant 0 : i32
    %c0_i32_0 = arith.constant 0 : i32
    return %arg0, %c0_i32, %2 : i32, i32, i32
  }
  func.func @transform_4(%arg0: i32, %arg1: i32, %arg2: i32) -> (i32, i32, i32, i32) {
    %c0_i32 = arith.constant 0 : i32
    %c0_i32_0 = arith.constant 0 : i32
    %c0_i32_1 = arith.constant 0 : i32
    return %arg0, %arg1, %c0_i32, %c0_i32_0 : i32, i32, i32, i32
  }
}

</mosaic_0001>

<llo_original>
// kernel: gscnn_loss.1
$region0: #{gscnn_loss.1}
  #allocation0 [shape = 'u32[]', space=smem, size = 0x4, offset = 0x4, fixed_abs, tag = 'smem constant byte address 0x4 - core index']
  #allocation1 [shape = 'u32[144,128]{1,0:T(1,128)}', space=vmem, size = 0x12000, scoped, tag = 'internal scratch']
  #allocation2 [shape = 'f32[9,4]{1,0:T(8,128)}', space=vmem, size = 0x2000, scoped, tag = 'scratch operand']
  %s0 = inlined_call_operand.vmem [shape: f32[2,8,256], index: 0, kind: input, shape index: {}]
  %s1 = inlined_call_operand.vmem [shape: s32[2,1,256], index: 1, kind: input, shape index: {}]
  %s2 = inlined_call_operand.vmem [shape: f32[2,1,256], index: 2, kind: input, shape index: {}]
  %s3 = inlined_call_operand.vmem [shape: f32[2,1,256], index: 3, kind: input, shape index: {}]
  %s4 = inlined_call_operand.vmem [shape: f32[2,1,9,4], index: 4, kind: output, shape index: {}]
  %s5 = sld [smem:[#allocation0]]
  $region57: #{gscnn_loss.1} parent=0
    _
  %s7 = ssub.s32 1, %s5
  %s8 = scalar_select 0, %s7, %s5
  loop: start=0, step=1, limit=6
  $region2: #{gscnn_loss.1} parent=0 // loop_pre_header
    _
  $region3: #{gscnn_loss.1} parent=0 // loop_header
    %s10 = sphi 0, %s14
    %p11 = scmp.ge.s32.totalorder %s10, 6
    %s17 = sphi 0, %s36
    %s18 = sphi 0, %s32
    %s19 = sphi 0, %s28
    %s20 = sphi 0, %s17
    %s21 = sphi 0, %s18
    %s22 = sphi 0, %s19
    %s23 = sphi 0, %s20
    %s24 = sphi 0, %s21
    %s25 = sphi 0, %s22
    %s49 = sphi 0, %s51
    %s52 = sphi 0, %s49
    %s53 = sphi 0, %s52
    %s69 = sphi 0, %s53
    %s85 = sphi 0, %s87
    %s88 = sphi 0, %s85
    %s89 = sphi 0, %s88
    %s105 = sphi 0, %s89
    %s121 = sphi 0, %s123
    %s124 = sphi 0, %s121
    %s125 = sphi 0, %s124
    %s141 = sphi 0, %s125
    %s157 = sphi 0, %s159
    %s160 = sphi 0, %s157
    %s161 = sphi 0, %s160
    %s177 = sphi 0, %s161
    %s185 = sphi 0, %s187
    %s188 = sphi 0, %s185
    %s189 = sphi 0, %s188
    %s205 = sphi 0, %s189
  $region4: #{gscnn_loss.1} parent=0 // loop_header_branch
    %13 = sbr.rel (%p11) target = $region8
  $region5: #{gscnn_loss.1} parent=0 // loop_body
    %s15 = ssub.s32 %s10, 1
    %s16 = ssub.s32 %s10, 2
    %s26 = sadd.s32 1, %s19
    %p27 = scmp.ge.s32.totalorder %s26, 2
    %s28 = scalar_select %p27, 0, %s26
    %s29 = sadd.s32 1, %s18
    %s30 = scalar_select %p27, %s29, %s18
    %p31 = scmp.ge.s32.totalorder %s30, 1
    %s32 = scalar_select %p31, 0, %s30
    %s33 = sadd.s32 1, %s17
    %s34 = scalar_select %p31, %s33, %s17
    %p35 = scmp.ge.s32.totalorder %s34, 2
    %s36 = scalar_select %p35, 0, %s34
    %s37 = smul.u32 %s18, 2
    %s38 = sadd.s32 %s37, %s19
    %p39 = scmp.lt.s32.totalorder %s38, 1
    %s40 = scalar_select %p39, %s38, 1
    %s41 = smul.u32 %s32, 2
    %s42 = sadd.s32 %s41, %s28
    %p43 = scmp.lt.s32.totalorder %s42, 1
    %s44 = scalar_select %p43, %s42, 1
    %s45 = ssub.s32 %s17, %s36
    %s46 = ssub.s32 %s40, %s44
    %s47 = sor.u32 %s45, %s46
    %p48 = scmp.eq.s32.totalorder %s47, 0
    %s50 = sadd.s32 %s49, 1
    %s51 = scalar_select %p48, %s49, %s50
    %p54 = pneg %p48
    %p55 = scmp.eq.s32.totalorder %s10, 3
    %p56 = por %p54, %p55
    %p57 = scmp.ne.s32.totalorder %s49, %s52
    %p58 = scmp.eq.s32.totalorder %s10, 0
    %p59 = por %p57, %p58
    %p60 = scmp.ne.s32.totalorder %s49, %s52
    %p61 = scmp.eq.s32.totalorder %s15, 3
    %p62 = por %p60, %p61
    %p63 = scmp.ne.s32.totalorder %s52, %s53
    %p64 = scmp.eq.s32.totalorder %s15, 0
    %p65 = por %p63, %p64
    %p66 = scmp.ne.s32.totalorder %s52, %s53
    %p67 = scmp.eq.s32.totalorder %s16, 3
    %p68 = por %p66, %p67
    %p70 = scmp.ne.s32.totalorder %s53, %s69
    %p71 = scmp.eq.s32.totalorder %s16, 0
    %p72 = por %p70, %p71
    %s73 = smul.u32 %s18, 2
    %s74 = sadd.s32 %s73, %s19
    %p75 = scmp.lt.s32.totalorder %s74, 1
    %s76 = scalar_select %p75, %s74, 1
    %s77 = smul.u32 %s32, 2
    %s78 = sadd.s32 %s77, %s28
    %p79 = scmp.lt.s32.totalorder %s78, 1
    %s80 = scalar_select %p79, %s78, 1
    %s81 = ssub.s32 %s17, %s36
    %s82 = ssub.s32 %s76, %s80
    %s83 = sor.u32 %s81, %s82
    %p84 = scmp.eq.s32.totalorder %s83, 0
    %s86 = sadd.s32 %s85, 1
    %s87 = scalar_select %p84, %s85, %s86
    %p90 = pneg %p84
    %p91 = scmp.eq.s32.totalorder %s10, 3
    %p92 = por %p90, %p91
    %p93 = scmp.ne.s32.totalorder %s85, %s88
    %p94 = scmp.eq.s32.totalorder %s10, 0
    %p95 = por %p93, %p94
    %p96 = scmp.ne.s32.totalorder %s85, %s88
    %p97 = scmp.eq.s32.totalorder %s15, 3
    %p98 = por %p96, %p97
    %p99 = scmp.ne.s32.totalorder %s88, %s89
    %p100 = scmp.eq.s32.totalorder %s15, 0
    %p101 = por %p99, %p100
    %p102 = scmp.ne.s32.totalorder %s88, %s89
    %p103 = scmp.eq.s32.totalorder %s16, 3
    %p104 = por %p102, %p103
    %p106 = scmp.ne.s32.totalorder %s89, %s105
    %p107 = scmp.eq.s32.totalorder %s16, 0
    %p108 = por %p106, %p107
    %s109 = smul.u32 %s18, 2
    %s110 = sadd.s32 %s109, %s19
    %p111 = scmp.lt.s32.totalorder %s110, 1
    %s112 = scalar_select %p111, %s110, 1
    %s113 = smul.u32 %s32, 2
    %s114 = sadd.s32 %s113, %s28
    %p115 = scmp.lt.s32.totalorder %s114, 1
    %s116 = scalar_select %p115, %s114, 1
    %s117 = ssub.s32 %s17, %s36
    %s118 = ssub.s32 %s112, %s116
    %s119 = sor.u32 %s117, %s118
    %p120 = scmp.eq.s32.totalorder %s119, 0
    %s122 = sadd.s32 %s121, 1
    %s123 = scalar_select %p120, %s121, %s122
    %p126 = pneg %p120
    %p127 = scmp.eq.s32.totalorder %s10, 3
    %p128 = por %p126, %p127
    %p129 = scmp.ne.s32.totalorder %s121, %s124
    %p130 = scmp.eq.s32.totalorder %s10, 0
    %p131 = por %p129, %p130
    %p132 = scmp.ne.s32.totalorder %s121, %s124
    %p133 = scmp.eq.s32.totalorder %s15, 3
    %p134 = por %p132, %p133
    %p135 = scmp.ne.s32.totalorder %s124, %s125
    %p136 = scmp.eq.s32.totalorder %s15, 0
    %p137 = por %p135, %p136
    %p138 = scmp.ne.s32.totalorder %s124, %s125
    %p139 = scmp.eq.s32.totalorder %s16, 3
    %p140 = por %p138, %p139
    %p142 = scmp.ne.s32.totalorder %s125, %s141
    %p143 = scmp.eq.s32.totalorder %s16, 0
    %p144 = por %p142, %p143
    %s145 = smul.u32 %s18, 2
    %s146 = sadd.s32 %s145, %s19
    %p147 = scmp.lt.s32.totalorder %s146, 1
    %s148 = scalar_select %p147, %s146, 1
    %s149 = smul.u32 %s32, 2
    %s150 = sadd.s32 %s149, %s28
    %p151 = scmp.lt.s32.totalorder %s150, 1
    %s152 = scalar_select %p151, %s150, 1
    %s153 = ssub.s32 %s17, %s36
    %s154 = ssub.s32 %s148, %s152
    %s155 = sor.u32 %s153, %s154
    %p156 = scmp.eq.s32.totalorder %s155, 0
    %s158 = sadd.s32 %s157, 1
    %s159 = scalar_select %p156, %s157, %s158
    %p162 = pneg %p156
    %p163 = scmp.eq.s32.totalorder %s10, 3
    %p164 = por %p162, %p163
    %p165 = scmp.ne.s32.totalorder %s157, %s160
    %p166 = scmp.eq.s32.totalorder %s10, 0
    %p167 = por %p165, %p166
    %p168 = scmp.ne.s32.totalorder %s157, %s160
    %p169 = scmp.eq.s32.totalorder %s15, 3
    %p170 = por %p168, %p169
    %p171 = scmp.ne.s32.totalorder %s160, %s161
    %p172 = scmp.eq.s32.totalorder %s15, 0
    %p173 = por %p171, %p172
    %p174 = scmp.ne.s32.totalorder %s160, %s161
    %p175 = scmp.eq.s32.totalorder %s16, 3
    %p176 = por %p174, %p175
    %p178 = scmp.ne.s32.totalorder %s161, %s177
    %p179 = scmp.eq.s32.totalorder %s16, 0
    %p180 = por %p178, %p179
    %s181 = ssub.s32 %s17, %s36
    %s182 = ssub.s32 %s18, %s32
    %s183 = sor.u32 %s181, %s182
    %p184 = scmp.eq.s32.totalorder %s183, 0
    %s186 = sadd.s32 %s185, 1
    %s187 = scalar_select %p184, %s185, %s186
    %p190 = pneg %p184
    %p191 = scmp.eq.s32.totalorder %s10, 3
    %p192 = por %p190, %p191
    %p193 = scmp.ne.s32.totalorder %s185, %s188
    %p194 = scmp.eq.s32.totalorder %s10, 0
    %p195 = por %p193, %p194
    %p196 = scmp.ne.s32.totalorder %s185, %s188
    %p197 = scmp.eq.s32.totalorder %s15, 3
    %p198 = por %p196, %p197
    %p199 = scmp.ne.s32.totalorder %s188, %s189
    %p200 = scmp.eq.s32.totalorder %s15, 0
    %p201 = por %p199, %p200
    %p202 = scmp.ne.s32.totalorder %s188, %s189
    %p203 = scmp.eq.s32.totalorder %s16, 3
    %p204 = por %p202, %p203
    %p206 = scmp.ne.s32.totalorder %s189, %s205
    %p207 = scmp.eq.s32.totalorder %s16, 0
    %p208 = por %p206, %p207
    %p209 = scmp.le.s32.totalorder 1, %s10
    %p210 = scmp.lt.s32.totalorder %s10, 5
    %p211 = pnand %p209, %p210
    %p212 = pneg %p211
    // Predicated region
    $region9: #{gscnn_loss.1} parent=5 // pred_check
      _
    $region10: #{gscnn_loss.1} parent=5 // pred_check_branch
      %214 = sbr.rel (%p211) target = $region12
    $region11: #{gscnn_loss.1} parent=5 // pred_region
      %s215 = ssub.s32 %s10, 1
    $region12: #{gscnn_loss.1} parent=5 // pred_fallthru
      _
    %p216 = scmp.lt.s32.totalorder %s10, 4
    // Predicated region
    $region13: #{gscnn_loss.1} parent=5 // pred_check
      %p217 = pneg %p216
    $region14: #{gscnn_loss.1} parent=5 // pred_check_branch
      %219 = sbr.rel (%p217) target = $region16
    $region15: #{gscnn_loss.1} parent=5 // pred_region
      // Predicated region
      $region17: #{gscnn_loss.1} parent=15 // pred_check
        %p220 = pneg %p59
      $region18: #{gscnn_loss.1} parent=15 // pred_check_branch
        %222 = sbr.rel (%p220) target = $region20
      $region19: #{gscnn_loss.1} parent=15 // pred_region
        %s223 = smul.u32 %s18, 2
        %s224 = sadd.s32 %s223, %s19
        %p225 = scmp.lt.s32.totalorder %s224, 1
        %s226 = scalar_select %p225, %s224, 1
        %p227 = scmp.lt.s32.totalorder %s17, 1
        %s228 = scalar_select %p227, %s17, 1
        %p229 = scmp.lt.s32.totalorder %s226, 1
        %s230 = scalar_select %p229, %s226, 1
        %s231 = smul.addr %s228, 2
        %s232 = sadd.s32 %s230, %s231
        %s233 = smul.addr %s232, 8
        %s234 = scalar_lea.vmem %s0, %s233
        %s235 = smul.u32 %s18, 2
        %s236 = sadd.s32 %s235, %s19
        %p237 = scmp.lt.s32.totalorder %s236, 1
        %s238 = scalar_select %p237, %s236, 1
      $region20: #{gscnn_loss.1} parent=15 // pred_fallthru
        _
      // Predicated region
      $region21: #{gscnn_loss.1} parent=15 // pred_check
        %p239 = pneg %p95
      $region22: #{gscnn_loss.1} parent=15 // pred_check_branch
        %241 = sbr.rel (%p239) target = $region24
      $region23: #{gscnn_loss.1} parent=15 // pred_region
        %s242 = smul.u32 %s18, 2
        %s243 = sadd.s32 %s242, %s19
        %p244 = scmp.lt.s32.totalorder %s243, 1
        %s245 = scalar_select %p244, %s243, 1
        %p246 = scmp.lt.s32.totalorder %s17, 1
        %s247 = scalar_select %p246, %s17, 1
        %p248 = scmp.lt.s32.totalorder %s245, 1
        %s249 = scalar_select %p248, %s245, 1
        %s250 = smul.addr %s247, 2
        %s251 = sadd.s32 %s249, %s250
        %s252 = scalar_lea.vmem %s1, %s251
        %s253 = smul.u32 %s18, 2
        %s254 = sadd.s32 %s253, %s19
        %p255 = scmp.lt.s32.totalorder %s254, 1
        %s256 = scalar_select %p255, %s254, 1
      $region24: #{gscnn_loss.1} parent=15 // pred_fallthru
        _
      // Predicated region
      $region25: #{gscnn_loss.1} parent=15 // pred_check
        %p257 = pneg %p131
      $region26: #{gscnn_loss.1} parent=15 // pred_check_branch
        %259 = sbr.rel (%p257) target = $region28
      $region27: #{gscnn_loss.1} parent=15 // pred_region
        %s260 = smul.u32 %s18, 2
        %s261 = sadd.s32 %s260, %s19
        %p262 = scmp.lt.s32.totalorder %s261, 1
        %s263 = scalar_select %p262, %s261, 1
        %p264 = scmp.lt.s32.totalorder %s17, 1
        %s265 = scalar_select %p264, %s17, 1
        %p266 = scmp.lt.s32.totalorder %s263, 1
        %s267 = scalar_select %p266, %s263, 1
        %s268 = smul.addr %s265, 2
        %s269 = sadd.s32 %s267, %s268
        %s270 = scalar_lea.vmem %s2, %s269
        %s271 = smul.u32 %s18, 2
        %s272 = sadd.s32 %s271, %s19
        %p273 = scmp.lt.s32.totalorder %s272, 1
        %s274 = scalar_select %p273, %s272, 1
      $region28: #{gscnn_loss.1} parent=15 // pred_fallthru
        _
      // Predicated region
      $region29: #{gscnn_loss.1} parent=15 // pred_check
        %p275 = pneg %p167
      $region30: #{gscnn_loss.1} parent=15 // pred_check_branch
        %277 = sbr.rel (%p275) target = $region32
      $region31: #{gscnn_loss.1} parent=15 // pred_region
        %s278 = smul.u32 %s18, 2
        %s279 = sadd.s32 %s278, %s19
        %p280 = scmp.lt.s32.totalorder %s279, 1
        %s281 = scalar_select %p280, %s279, 1
        %p282 = scmp.lt.s32.totalorder %s17, 1
        %s283 = scalar_select %p282, %s17, 1
        %p284 = scmp.lt.s32.totalorder %s281, 1
        %s285 = scalar_select %p284, %s281, 1
        %s286 = smul.addr %s283, 2
        %s287 = sadd.s32 %s285, %s286
        %s288 = scalar_lea.vmem %s3, %s287
        %s289 = smul.u32 %s18, 2
        %s290 = sadd.s32 %s289, %s19
        %p291 = scmp.lt.s32.totalorder %s290, 1
        %s292 = scalar_select %p291, %s290, 1
      $region32: #{gscnn_loss.1} parent=15 // pred_fallthru
        _
    $region16: #{gscnn_loss.1} parent=5 // pred_fallthru
      _
    %p293 = scmp.le.s32.totalorder 1, %s10
    %p294 = scmp.lt.s32.totalorder %s10, 5
    %p295 = pnand %p293, %p294
    %p296 = pneg %p295
    // Predicated region
    $region33: #{gscnn_loss.1} parent=5 // pred_check
      _
    $region34: #{gscnn_loss.1} parent=5 // pred_check_branch
      %298 = sbr.rel (%p295) target = $region36
    $region35: #{gscnn_loss.1} parent=5 // pred_region
      %s299 = ssub.s32 %s10, 1
      %s300 = smul.u32 %s21, 2
      %s301 = sadd.s32 %s300, %s22
      %p302 = scmp.lt.s32.totalorder %s301, 1
      %s303 = scalar_select %p302, %s301, 1
      %p304 = scmp.lt.s32.totalorder %s20, 1
      %s305 = scalar_select %p304, %s20, 1
      %p306 = scmp.lt.s32.totalorder %s303, 1
      %s307 = scalar_select %p306, %s303, 1
      %s308 = smul.addr %s305, 2
      %s309 = sadd.s32 %s307, %s308
      %s310 = smul.addr %s309, 8
      %s311 = scalar_lea.vmem %s0, %s310
      %p312 = pneg %p65
      %p313 = pneg %p62
      %s314 = smul.u32 %s21, 2
      %s315 = sadd.s32 %s314, %s22
      %p316 = scmp.lt.s32.totalorder %s315, 1
      %s317 = scalar_select %p316, %s315, 1
      %p318 = scmp.lt.s32.totalorder %s20, 1
      %s319 = scalar_select %p318, %s20, 1
      %p320 = scmp.lt.s32.totalorder %s317, 1
      %s321 = scalar_select %p320, %s317, 1
      %s322 = smul.addr %s319, 2
      %s323 = sadd.s32 %s321, %s322
      %s324 = scalar_lea.vmem %s1, %s323
      %p325 = pneg %p101
      %p326 = pneg %p98
      %s327 = smul.u32 %s21, 2
      %s328 = sadd.s32 %s327, %s22
      %p329 = scmp.lt.s32.totalorder %s328, 1
      %s330 = scalar_select %p329, %s328, 1
      %p331 = scmp.lt.s32.totalorder %s20, 1
      %s332 = scalar_select %p331, %s20, 1
      %p333 = scmp.lt.s32.totalorder %s330, 1
      %s334 = scalar_select %p333, %s330, 1
      %s335 = smul.addr %s332, 2
      %s336 = sadd.s32 %s334, %s335
      %s337 = scalar_lea.vmem %s2, %s336
      %p338 = pneg %p137
      %p339 = pneg %p134
      %s340 = smul.u32 %s21, 2
      %s341 = sadd.s32 %s340, %s22
      %p342 = scmp.lt.s32.totalorder %s341, 1
      %s343 = scalar_select %p342, %s341, 1
      %p344 = scmp.lt.s32.totalorder %s20, 1
      %s345 = scalar_select %p344, %s20, 1
      %p346 = scmp.lt.s32.totalorder %s343, 1
      %s347 = scalar_select %p346, %s343, 1
      %s348 = smul.addr %s345, 2
      %s349 = sadd.s32 %s347, %s348
      %s350 = scalar_lea.vmem %s3, %s349
      %p351 = pneg %p173
      %p352 = pneg %p170
      %p353 = pneg %p201
      %p354 = pneg %p198
      %p355 = scmp.lt.s32.totalorder %s20, 1
      %s356 = scalar_select %p355, %s20, 1
      %p357 = scmp.lt.s32.totalorder %s21, 0
      %s358 = scalar_select %p357, %s21, 0
      %s359 = smul.addr %s358, 2
      %s360 = smul.addr %s356, 2
      %s361 = sadd.s32 %s359, %s360
      %s362 = smul.addr %s361, 8
      %s363 = scalar_lea.vmem %s4, %s362
      %s364 = smul.u32 %s21, 2
      %s365 = sadd.s32 %s364, %s22
      %p366 = scmp.lt.s32.totalorder %s365, 1
      %s367 = scalar_select %p366, %s365, 1
      %p368 = scmp.lt.s32.totalorder %s20, 1
      %s369 = scalar_select %p368, %s20, 1
      %p370 = scmp.lt.s32.totalorder %s367, 1
      %s371 = scalar_select %p370, %s367, 1
      %s372 = smul.addr %s369, 2
      %s373 = sadd.s32 %s371, %s372
      %s374 = smul.addr %s373, 8
      %s375 = scalar_lea.vmem %s0, %s374
      %s376 = smul.u32 %s21, 2
      %s377 = sadd.s32 %s376, %s22
      %p378 = scmp.lt.s32.totalorder %s377, 1
      %s379 = scalar_select %p378, %s377, 1
      %s380 = smul.u32 %s21, 2
      %s381 = sadd.s32 %s380, %s22
      %p382 = scmp.lt.s32.totalorder %s381, 1
      %s383 = scalar_select %p382, %s381, 1
      %p384 = scmp.lt.s32.totalorder %s20, 1
      %s385 = scalar_select %p384, %s20, 1
      %p386 = scmp.lt.s32.totalorder %s383, 1
      %s387 = scalar_select %p386, %s383, 1
      %s388 = smul.addr %s385, 2
      %s389 = sadd.s32 %s387, %s388
      %s390 = scalar_lea.vmem %s1, %s389
      %s391 = smul.u32 %s21, 2
      %s392 = sadd.s32 %s391, %s22
      %p393 = scmp.lt.s32.totalorder %s392, 1
      %s394 = scalar_select %p393, %s392, 1
      %s395 = smul.u32 %s21, 2
      %s396 = sadd.s32 %s395, %s22
      %p397 = scmp.lt.s32.totalorder %s396, 1
      %s398 = scalar_select %p397, %s396, 1
      %p399 = scmp.lt.s32.totalorder %s20, 1
      %s400 = scalar_select %p399, %s20, 1
      %p401 = scmp.lt.s32.totalorder %s398, 1
      %s402 = scalar_select %p401, %s398, 1
      %s403 = smul.addr %s400, 2
      %s404 = sadd.s32 %s402, %s403
      %s405 = scalar_lea.vmem %s2, %s404
      %s406 = smul.u32 %s21, 2
      %s407 = sadd.s32 %s406, %s22
      %p408 = scmp.lt.s32.totalorder %s407, 1
      %s409 = scalar_select %p408, %s407, 1
      %s410 = smul.u32 %s21, 2
      %s411 = sadd.s32 %s410, %s22
      %p412 = scmp.lt.s32.totalorder %s411, 1
      %s413 = scalar_select %p412, %s411, 1
      %p414 = scmp.lt.s32.totalorder %s20, 1
      %s415 = scalar_select %p414, %s20, 1
      %p416 = scmp.lt.s32.totalorder %s413, 1
      %s417 = scalar_select %p416, %s413, 1
      %s418 = smul.addr %s415, 2
      %s419 = sadd.s32 %s417, %s418
      %s420 = scalar_lea.vmem %s3, %s419
      %s421 = smul.u32 %s21, 2
      %s422 = sadd.s32 %s421, %s22
      %p423 = scmp.lt.s32.totalorder %s422, 1
      %s424 = scalar_select %p423, %s422, 1
      %p425 = scmp.lt.s32.totalorder %s20, 1
      %s426 = scalar_select %p425, %s20, 1
      %p427 = scmp.lt.s32.totalorder %s21, 0
      %s428 = scalar_select %p427, %s21, 0
      %s429 = smul.addr %s428, 2
      %s430 = smul.addr %s426, 2
      %s431 = sadd.s32 %s429, %s430
      %s432 = smul.addr %s431, 8
      %s433 = scalar_lea.vmem %s4, %s432
      %p434 = scmp.eq.s32.totalorder %s22, 0
      // Predicated region
      $region37: #{gscnn_loss.1} parent=35 // pred_check
        %p435 = pneg %p434
      $region38: #{gscnn_loss.1} parent=35 // pred_check_branch
        %437 = sbr.rel (%p435) target = $region40
      $region39: #{gscnn_loss.1} parent=35 // pred_region
        %vm438 = vcmask 31744
        %439 = vst.msk [vmem:[#allocation2] sm:$0xff] %vm438, 0.0
        %vm440 = vcmask 24576
        %441 = vst.msk [vmem:[#allocation2 + $0x8] sm:$0x1] %vm440, 0.0
      $region40: #{gscnn_loss.1} parent=35 // pred_fallthru
        _
      %v442 = vld [vmem:[%s375] sm:$0xff]
      %v443 = vld [vmem:[%s390] sm:$0x1]
      %v444 = vld [vmem:[%s405] sm:$0x1]
      %v445 = vld [vmem:[%s420] sm:$0x1]
      %v446 = vlaneseq
      %v447 = vshrl.u32 %v446, 7
      %v448 = vlaneseq
      %v449 = vshrl.u32 %v448, 7
      %v450 = vsub.s32 0, %v449
      %v451 = vrot.slane %v443, %v450
      %vm452 = vcmp.eq.s32.totalorder %v451, %v447
      %vm453 = vcmp.ge.s32.totalorder %v443, 0
      %vm454 = vcmp.lt.s32.totalorder %v443, 8
      %vm455 = vmand %vm453, %vm454
      %v456 = vsel %vm452, 1, 0
      %v457 = vcvt.s32.f32 %v456
      %v458 = vrot.slane %v442, 4
      %v459 = vmax.f32 %v442, %v458
      %v460 = vrot.slane %v459, 2
      %v461 = vmax.f32 %v459, %v460
      %v462 = vrot.slane %v461, 1
      %v463 = vmax.f32 %v461, %v462
      %v464 = vsub.f32 %v442, %v463
      %v465 = vmul.f32 %v464, 1.442695
      %v466 = vpow.pop %v465
      %v467 = vrot.slane %v466, 4
      %v468 = vadd.f32 %v466, %v467
      %v469 = vrot.slane %v468, 2
      %v470 = vadd.f32 %v468, %v469
      %v471 = vrot.slane %v470, 1
      %v472 = vadd.f32 %v470, %v471
      %v473 = vlog2.pop %v472
      %v474 = vmul.f32 %v473, 0.6931472
      %v475 = vadd.f32 %v463, %v474
      %v476 = vsel %vm452, %v442, 0.0
      %v477 = vrot.slane %v476, 4
      %v478 = vadd.f32 %v476, %v477
      %v479 = vrot.slane %v478, 2
      %v480 = vadd.f32 %v478, %v479
      %v481 = vrot.slane %v480, 1
      %v482 = vadd.f32 %v480, %v481
      %v483 = vsub.f32 %v482, %v475
      %v484 = vsel %vm455, %v483, 0.0
      %vm485 = vcmp.gt.f32.partialorder %v444, 0.0
      %v486 = vsel %vm485, 1, 0
      %v487 = vcvt.s32.f32 %v486
      %v489 = vlaneseq
      %v490 = vshrl.u32 %v489, 7
      %v491 = vsub.s32 0, %v490
      %v492 = vrot.slane %v487, %v491
      %v494 = vmul.f32 %v457, %v492
      %495 = vadd.xlane.f32.xlu0 %v457
      %v496 = vpop.xlane.xlu0 %495
      %v498 = vlaneseq
      %v499 = vshrl.u32 %v498, 7
      %v500 = vsub.s32 0, %v499
      %v501 = vrot.slane %v484, %v500
      %v503 = vmul.f32 %v457, %v501
      %504 = vadd.xlane.f32.xlu0 %v503
      %v505 = vpop.xlane.xlu0 %504
      %506 = vadd.xlane.f32.xlu0 %v494
      %v507 = vpop.xlane.xlu0 %506
      %v508 = vmul.f32 %v494, %v501
      %509 = vadd.xlane.f32.xlu0 %v508
      %v510 = vpop.xlane.xlu0 %509
      %vm511 = vcmask 7168
      %v512 = vsel %vm511, %v496, %v505
      %vm513 = vcmask 15360
      %v514 = vsel %vm513, %v512, %v507
      %vm515 = vcmask 23552
      %v516 = vsel %vm515, %v514, %v510
      %vm517 = vcmp.eq.f32.partialorder %v445, 1.0
      %vm518 = vcmp.eq.f32.partialorder %v445, 0.0
      %v519 = vmax.f32 %v444, 0.0
      %v520 = vmul.f32 %v444, %v445
      %v521 = vsub.f32 %v519, %v520
      %v522 = vand.u32 2147483647, %v444
      %v523 = vsub.f32 0.0, %v522
      %v524 = vmul.f32 %v523, 1.442695
      %v525 = vpow.pop %v524
      %v526 = vadd.f32 %v525, 1.0
      %v527 = vlog2.pop %v526
      %v528 = vmul.f32 %v527, 0.6931472
      %v529 = vadd.f32 %v521, %v528
      %v530 = vsel %vm517, 1, 0
      %v531 = vcvt.s32.f32 %v530
      %v532 = vsel %vm518, 1, 0
      %v533 = vcvt.s32.f32 %v532
      %vm534 = vcmask 1040384
      %v535 = vsel %vm534, %v531, 0.0
      %536 = vadd.xlane.f32.xlu0 %v535
      %v537 = vpop.xlane.xlu0 %536
      %v538 = vrot.slane %v537, 4
      %v539 = vadd.f32 %v537, %v538
      %v540 = vrot.slane %v539, 2
      %v541 = vadd.f32 %v539, %v540
      %v542 = vrot.slane %v541, 1
      %v543 = vadd.f32 %v541, %v542
      %s544 = vtos %v543
      %v545 = vstv %s544
      %v546 = vsel %vm534, %v533, 0.0
      %547 = vadd.xlane.f32.xlu0 %v546
      %v548 = vpop.xlane.xlu0 %547
      %v549 = vrot.slane %v548, 4
      %v550 = vadd.f32 %v548, %v549
      %v551 = vrot.slane %v550, 2
      %v552 = vadd.f32 %v550, %v551
      %v553 = vrot.slane %v552, 1
      %v554 = vadd.f32 %v552, %v553
      %s555 = vtos %v554
      %v556 = vstv %s555
      %v557 = vmul.f32 %v531, %v529
      %v558 = vsel %vm534, %v557, 0.0
      %559 = vadd.xlane.f32.xlu0 %v558
      %v560 = vpop.xlane.xlu0 %559
      %v561 = vrot.slane %v560, 4
      %v562 = vadd.f32 %v560, %v561
      %v563 = vrot.slane %v562, 2
      %v564 = vadd.f32 %v562, %v563
      %v565 = vrot.slane %v564, 1
      %v566 = vadd.f32 %v564, %v565
      %s567 = vtos %v566
      %v568 = vstv %s567
      %v569 = vmul.f32 %v533, %v529
      %v570 = vsel %vm534, %v569, 0.0
      %571 = vadd.xlane.f32.xlu0 %v570
      %v572 = vpop.xlane.xlu0 %571
      %v573 = vrot.slane %v572, 4
      %v574 = vadd.f32 %v572, %v573
      %v575 = vrot.slane %v574, 2
      %v576 = vadd.f32 %v574, %v575
      %v577 = vrot.slane %v576, 1
      %v578 = vadd.f32 %v576, %v577
      %s579 = vtos %v578
      %v580 = vstv %s579
      %v581 = vsel %vm511, %v545, %v556
      %v582 = vsel %vm513, %v581, %v568
      %v583 = vsel %vm515, %v582, %v580
      %v584 = vld [vmem:[#allocation2] sm:$0xff]
      %v585 = vadd.f32 %v584, %v516
      %vm586 = vcmask 31744
      %587 = vst.msk [vmem:[#allocation2] sm:$0xff] %vm586, %v585
      %v588 = vld [vmem:[#allocation2 + $0x8] sm:$0x1]
      %v589 = vadd.f32 %v588, %v583
      %vm590 = vcmask 24576
      %591 = vst.msk [vmem:[#allocation2 + $0x8] sm:$0x1] %vm590, %v589
      %p592 = scmp.eq.s32.totalorder %s22, 1
      // Predicated region
      $region41: #{gscnn_loss.1} parent=35 // pred_check
        %p593 = pneg %p592
      $region42: #{gscnn_loss.1} parent=35 // pred_check_branch
        %595 = sbr.rel (%p593) target = $region44
      $region43: #{gscnn_loss.1} parent=35 // pred_region
        %v596 = vld [vmem:[#allocation2] sm:$0xff]
        %v597 = vld [vmem:[#allocation2 + $0x8] sm:$0x1]
        %598 = vst.msk [vmem:[%s433] sm:$0xff] %vm586, %v596
        %599 = vst.msk [vmem:[%s433 + $0x8] sm:$0x1] %vm590, %v597
      $region44: #{gscnn_loss.1} parent=35 // pred_fallthru
        _
      %p600 = scmp.lt.s32.totalorder %s20, 1
      %s601 = scalar_select %p600, %s20, 1
      %p602 = scmp.lt.s32.totalorder %s21, 0
      %s603 = scalar_select %p602, %s21, 0
      %s604 = smul.addr %s603, 2
      %s605 = smul.addr %s601, 2
      %s606 = sadd.s32 %s604, %s605
      %s607 = smul.addr %s606, 8
      %s608 = scalar_lea.vmem %s4, %s607
      // Predicated region
      $region45: #{gscnn_loss.1} parent=35 // pred_check
        %p609 = pneg %p198
      $region46: #{gscnn_loss.1} parent=35 // pred_check_branch
        %611 = sbr.rel (%p609) target = $region48
      $region47: #{gscnn_loss.1} parent=35 // pred_region
        _
      $region48: #{gscnn_loss.1} parent=35 // pred_fallthru
        _
    $region36: #{gscnn_loss.1} parent=5 // pred_fallthru
      _
    %p612 = scmp.le.s32.totalorder 2, %s10
    // Predicated region
    $region49: #{gscnn_loss.1} parent=5 // pred_check
      %p613 = pneg %p612
    $region50: #{gscnn_loss.1} parent=5 // pred_check_branch
      %615 = sbr.rel (%p613) target = $region52
    $region51: #{gscnn_loss.1} parent=5 // pred_region
      %s616 = ssub.s32 %s10, 2
      // Predicated region
      $region53: #{gscnn_loss.1} parent=51 // pred_check
        %p617 = pneg %p204
      $region54: #{gscnn_loss.1} parent=51 // pred_check_branch
        %619 = sbr.rel (%p617) target = $region56
      $region55: #{gscnn_loss.1} parent=51 // pred_region
        %p620 = scmp.lt.s32.totalorder %s23, 1
        %s621 = scalar_select %p620, %s23, 1
        %p622 = scmp.lt.s32.totalorder %s24, 0
        %s623 = scalar_select %p622, %s24, 0
        %s624 = smul.addr %s623, 2
        %s625 = smul.addr %s621, 2
        %s626 = sadd.s32 %s624, %s625
        %s627 = smul.addr %s626, 8
        %s628 = scalar_lea.vmem %s4, %s627
      $region56: #{gscnn_loss.1} parent=51 // pred_fallthru
        _
    $region52: #{gscnn_loss.1} parent=5 // pred_fallthru
      _
  $region6: #{gscnn_loss.1} parent=0 // loop_footer
    %s14 = sadd.s32 1, %s10
  $region7: #{gscnn_loss.1} parent=0 // loop_footer_branch
    %9 = sbr.rel target = $region3
  $region8: #{gscnn_loss.1} parent=0 // loop_exit
    _

</llo_original>
